<compile_context>
chip_gen: v7x
topology: tpu7x:2x2x1
jax: 0.10.0
libtpu: 0.0.40
codegen_flags: <defaults>
</compile_context>

<pallas_src>
import functools

import jax
import jax.numpy as jnp
from jax.experimental import pallas as pl
from jax.experimental.pallas import tpu as pltpu

_LANE = 128


def _flip_block_kernel(x_ref, o_ref):
    # x_ref / o_ref: (B, ch_blk, s_blk, L) VMEM tiles.  Output channel c of
    # this block corresponds to input channel (ch_blk-1-c) of the mirrored
    # input block (see the index_maps).  Each per-channel slab is a dense
    # (B, s_blk, L) region of whole vreg tiles -> unmasked loads/stores.
    ch_blk = o_ref.shape[1]
    if ch_blk == 1:
        o_ref[...] = x_ref[...]
    else:
        for c in range(ch_blk):  # static, fully unrolled dense slab copies
            src = ch_blk - 1 - c
            o_ref[:, c : c + 1, :, :] = x_ref[:, src : src + 1, :, :]


def _max_block_bytes():
    """Per-generation block budget (2 in-bufs + 2 out-bufs stay << scoped VMEM)."""
    try:
        kind = jax.devices()[0].device_kind.lower()
    except Exception:  # pragma: no cover - defensive
        kind = ""
    if "v5" in kind:
        # v5e scoped-VMEM default is 16 MiB; keep blocks ~3 MiB (footprint ~12 MiB).
        return 3 * 1024 * 1024
    # v6e / v7x: 32 MiB scoped default; ~4 MiB blocks -> ~16 MiB footprint.
    return 4 * 1024 * 1024


def _plan_blocks(B, C, HW, itemsize):
    """Pick (L, S, s_blk, ch_blk) tiling for the (B, C, S, L) view."""
    budget = _max_block_bytes()

    # Lane-dense factorization of the collapsed spatial axis.
    if HW % _LANE == 0:
        L, S = _LANE, HW // _LANE
    else:
        # Full-dim lane block (may be lane-masked only for tiny HW < 128).
        L, S = HW, 1

    # Spatial (sublane) tiling only if a single channel would blow the budget.
    per_channel = B * S * L * itemsize
    s_blk = S
    if per_channel > budget and S % 8 == 0:
        d = 8
        while d <= S:
            if S % d == 0 and B * d * L * itemsize <= budget:
                s_blk = d
            d += 8
    per_channel_blk = B * s_blk * L * itemsize

    # Channel blocking: any divisor of C is legal (channel is a leading block
    # dim), sized by the VMEM byte budget; max_unroll only bounds code size.
    max_unroll = 128
    ch_blk = 1
    for d in range(1, C + 1):
        if C % d == 0 and d <= max_unroll and d * per_channel_blk <= budget:
            ch_blk = d

    # Prefer >= 2 (balanced) grid steps so v7x can shard across both TCs.
    if ch_blk == C and C > 1 and C % 2 == 0 and (S // s_blk) == 1:
        ch_blk = C // 2

    return L, S, s_blk, ch_blk


@functools.partial(jax.jit, static_argnames=("inverse",))
def flip_forward(x, inverse=False):
    """Pallas equivalent of Flip.forward.

    Args:
      x: array of shape (B, C, *spatial)  (NCHW in the reference module).
      inverse: unused (forward semantics are identical for inverse=True/False).

    Returns:
      (x flipped along axis 1, zeros of shape (B,) float32)
    """
    del inverse
    B, C = x.shape[0], x.shape[1]
    HW = 1
    for s in x.shape[2:]:
        HW *= s

    itemsize = x.dtype.itemsize
    L, S, s_blk, ch_blk = _plan_blocks(B, C, HW, itemsize)
    nblk_c = C // ch_blk
    nblk_s = S // s_blk

    # (B, C, S, L) view: no data movement, just a lane-dense 4-D layout.
    x4 = x.reshape(B, C, S, L)

    def in_map(j, s):
        return (0, nblk_c - 1 - j, s, 0)   # mirrored channel block

    def out_map(j, s):
        return (0, j, s, 0)

    nbytes = B * C * HW * itemsize
    cost = pl.CostEstimate(flops=0, transcendentals=0, bytes_accessed=2 * nbytes)

    flipped4 = pl.pallas_call(
        _flip_block_kernel,
        out_shape=jax.ShapeDtypeStruct((B, C, S, L), x.dtype),
        grid=(nblk_c, nblk_s),
        in_specs=[pl.BlockSpec((B, ch_blk, s_blk, L), in_map)],
        out_specs=pl.BlockSpec((B, ch_blk, s_blk, L), out_map),
        compiler_params=pltpu.CompilerParams(
            dimension_semantics=("parallel", "parallel"),
            vmem_limit_bytes=32 * 1024 * 1024,
        ),
        cost_estimate=cost,
    )(x4)

    flipped = flipped4.reshape(x.shape)
    # torch.zeros(batch_size) -> produced in the wrapper (kept out of the
    # kernel so all grid steps stay independent / parallel).
    zeros = jnp.zeros((B,), dtype=jnp.float32)
    return flipped, zeros


if __name__ == "__main__":
    key = jax.random.PRNGKey(0)
    B, C, H, W = 2, 4, 16, 16
    x = jax.random.normal(key, (B, C, H, W), dtype=jnp.float32)

    out, zeros = flip_forward(x)
    out = jax.block_until_ready(out)
    zeros = jax.block_until_ready(zeros)

    # Reference check against plain-JAX semantics of the PyTorch module.
    ref_out = jnp.flip(x, axis=1)
    assert out.shape == (B, C, H, W) and out.dtype == x.dtype
    assert zeros.shape == (B,) and zeros.dtype == jnp.float32
    assert jnp.array_equal(out, ref_out)
    assert not bool(jnp.any(zeros))

    print("KERNEL_OK")
</pallas_src>

<mosaic_0001>
module attributes {stable_mosaic.version = 11 : i64} {
  func.func @_flip_block_kernel(%arg0: i32, %arg1: i32, %arg2: memref<2x2x2x128xf32, #tpu.memory_space<vmem>>, %arg3: memref<2x2x2x128xf32, #tpu.memory_space<vmem>>) attributes {dimension_semantics = [#tpu.dimension_semantics<parallel>, #tpu.dimension_semantics<parallel>], iteration_bounds = array<i64: 2, 1>, scalar_prefetch = 0 : i64, scratch_operands = 0 : i64, tpu.core_type = #tpu.core_type<tc>, window_params = [{transform_indices = @transform_0, window_bounds = array<i64: 2, 2, 2, 128>}, {transform_indices = @transform_1, window_bounds = array<i64: 2, 2, 2, 128>}]} {
    %c0 = arith.constant 0 : index
    %c1 = arith.constant 1 : index
    %c0_0 = arith.constant 0 : index
    %c0_1 = arith.constant 0 : index
    %0 = vector.load %arg2[%c0, %c1, %c0_0, %c0_1] : memref<2x2x2x128xf32, #tpu.memory_space<vmem>>, vector<2x1x2x128xf32>
    %c0_2 = arith.constant 0 : index
    %c0_3 = arith.constant 0 : index
    %c0_4 = arith.constant 0 : index
    %c0_5 = arith.constant 0 : index
    %1 = vector.load %arg3[%c0_2, %c0_3, %c0_4, %c0_5] : memref<2x2x2x128xf32, #tpu.memory_space<vmem>>, vector<2x1x2x128xf32>
    tpu.vector_store %arg3[%c0_2, %c0_3, %c0_4, %c0_5], %0 {strides = array<i32>} : memref<2x2x2x128xf32, #tpu.memory_space<vmem>>, vector<2x1x2x128xf32>,
    %c0_6 = arith.constant 0 : index
    %c0_7 = arith.constant 0 : index
    %c0_8 = arith.constant 0 : index
    %c0_9 = arith.constant 0 : index
    %2 = vector.load %arg2[%c0_6, %c0_7, %c0_8, %c0_9] : memref<2x2x2x128xf32, #tpu.memory_space<vmem>>, vector<2x1x2x128xf32>
    %c0_10 = arith.constant 0 : index
    %c1_11 = arith.constant 1 : index
    %c0_12 = arith.constant 0 : index
    %c0_13 = arith.constant 0 : index
    %3 = vector.load %arg3[%c0_10, %c1_11, %c0_12, %c0_13] : memref<2x2x2x128xf32, #tpu.memory_space<vmem>>, vector<2x1x2x128xf32>
    tpu.vector_store %arg3[%c0_10, %c1_11, %c0_12, %c0_13], %2 {strides = array<i32>} : memref<2x2x2x128xf32, #tpu.memory_space<vmem>>, vector<2x1x2x128xf32>,
    return
  }
  func.func @transform_0(%arg0: i32, %arg1: i32) -> (i32, i32, i32, i32) {
    %c1_i32 = arith.constant 1 : i32
    %0 = arith.subi %c1_i32, %arg0 : i32
    %c0_i32 = arith.constant 0 : i32
    %c0_i32_0 = arith.constant 0 : i32
    %c0_i32_1 = arith.constant 0 : i32
    return %c0_i32, %0, %arg1, %c0_i32_0 : i32, i32, i32, i32
  }
  func.func @transform_1(%arg0: i32, %arg1: i32) -> (i32, i32, i32, i32) {
    %c0_i32 = arith.constant 0 : i32
    %c0_i32_0 = arith.constant 0 : i32
    %c0_i32_1 = arith.constant 0 : i32
    return %c0_i32, %arg0, %arg1, %c0_i32_0 : i32, i32, i32, i32
  }
}

</mosaic_0001>

<llo_original>
// kernel: flip_forward.1
$region0: #{flip_forward.1}
  #allocation0 [shape = 'u32[]', space=smem, size = 0x4, offset = 0x4, fixed_abs, tag = 'smem constant byte address 0x4 - core index']
  #allocation1 [shape = 'u32[144,128]{1,0:T(1,128)}', space=vmem, size = 0x12000, scoped, tag = 'internal scratch']
  %s0 = inlined_call_operand.vmem [shape: f32[2,4,2,128], index: 0, kind: input, shape index: {}]
  %s1 = inlined_call_operand.vmem [shape: f32[2,4,2,128], index: 1, kind: output, shape index: {}]
  %s2 = sld [smem:[#allocation0]]
  $region115: #{flip_forward.1} parent=0
    _
  %s4 = ssub.s32 1, %s2
  %s5 = scalar_select 0, %s4, %s2
  $region1: #{flip_forward.1} parent=0
    #allocation2 [shape = 'u8[8192]{0}', space=vmem, size = 0x2000, scoped, tag = 'input window, operand 0']
    #allocation3 [shape = 'u8[8192]{0}', space=vmem, size = 0x2000, scoped, tag = 'output window, operand 0']
    loop: start=0, step=1, limit=4
    $region2: #{flip_forward.1} parent=1 // loop_pre_header
      _
    $region3: #{flip_forward.1} parent=1 // loop_header
      %s7 = sphi 0, %s11
      %p8 = scmp.ge.s32.totalorder %s7, 4
      %s14 = sphi 0, %s26
      %s15 = sphi 0, %s22
      %s16 = sphi 0, %s14
      %s17 = sphi 0, %s15
      %s18 = sphi 0, %s16
      %s19 = sphi 0, %s17
      %s33 = sphi 0, %s35
      %s36 = sphi 0, %s33
      %s37 = sphi 0, %s36
      %s53 = sphi 0, %s37
      %s61 = sphi 0, %s63
      %s64 = sphi 0, %s61
      %s65 = sphi 0, %s64
      %s81 = sphi 0, %s65
    $region4: #{flip_forward.1} parent=1 // loop_header_branch
      %10 = sbr.rel (%p8) target = $region8
    $region5: #{flip_forward.1} parent=1 // loop_body
      %s12 = ssub.s32 %s7, 1
      %s13 = ssub.s32 %s7, 2
      %s20 = sadd.s32 1, %s15
      %p21 = scmp.ge.s32.totalorder %s20, 1
      %s22 = scalar_select %p21, 0, %s20
      %s23 = sadd.s32 1, %s14
      %s24 = scalar_select %p21, %s23, %s14
      %p25 = scmp.ge.s32.totalorder %s24, 2
      %s26 = scalar_select %p25, 0, %s24
      %s27 = ssub.s32 1, %s14
      %s28 = ssub.s32 1, %s26
      %s29 = ssub.s32 %s27, %s28
      %s30 = ssub.s32 %s15, %s22
      %s31 = sor.u32 %s29, %s30
      %p32 = scmp.eq.s32.totalorder %s31, 0
      %s34 = sadd.s32 %s33, 1
      %s35 = scalar_select %p32, %s33, %s34
      %p38 = pneg %p32
      %p39 = scmp.eq.s32.totalorder %s7, 1
      %p40 = por %p38, %p39
      %p41 = scmp.ne.s32.totalorder %s33, %s36
      %p42 = scmp.eq.s32.totalorder %s7, 0
      %p43 = por %p41, %p42
      %p44 = scmp.ne.s32.totalorder %s33, %s36
      %p45 = scmp.eq.s32.totalorder %s12, 1
      %p46 = por %p44, %p45
      %p47 = scmp.ne.s32.totalorder %s36, %s37
      %p48 = scmp.eq.s32.totalorder %s12, 0
      %p49 = por %p47, %p48
      %p50 = scmp.ne.s32.totalorder %s36, %s37
      %p51 = scmp.eq.s32.totalorder %s13, 1
      %p52 = por %p50, %p51
      %p54 = scmp.ne.s32.totalorder %s37, %s53
      %p55 = scmp.eq.s32.totalorder %s13, 0
      %p56 = por %p54, %p55
      %s57 = ssub.s32 %s14, %s26
      %s58 = ssub.s32 %s15, %s22
      %s59 = sor.u32 %s57, %s58
      %p60 = scmp.eq.s32.totalorder %s59, 0
      %s62 = sadd.s32 %s61, 1
      %s63 = scalar_select %p60, %s61, %s62
      %p66 = pneg %p60
      %p67 = scmp.eq.s32.totalorder %s7, 1
      %p68 = por %p66, %p67
      %p69 = scmp.ne.s32.totalorder %s61, %s64
      %p70 = scmp.eq.s32.totalorder %s7, 0
      %p71 = por %p69, %p70
      %p72 = scmp.ne.s32.totalorder %s61, %s64
      %p73 = scmp.eq.s32.totalorder %s12, 1
      %p74 = por %p72, %p73
      %p75 = scmp.ne.s32.totalorder %s64, %s65
      %p76 = scmp.eq.s32.totalorder %s12, 0
      %p77 = por %p75, %p76
      %p78 = scmp.ne.s32.totalorder %s64, %s65
      %p79 = scmp.eq.s32.totalorder %s13, 1
      %p80 = por %p78, %p79
      %p82 = scmp.ne.s32.totalorder %s65, %s81
      %p83 = scmp.eq.s32.totalorder %s13, 0
      %p84 = por %p82, %p83
      %p85 = scmp.le.s32.totalorder 1, %s7
      %p86 = scmp.lt.s32.totalorder %s7, 3
      %p87 = pnand %p85, %p86
      %p88 = pneg %p87
      // Predicated region
      $region9: #{flip_forward.1} parent=5 // pred_check
        _
      $region10: #{flip_forward.1} parent=5 // pred_check_branch
        %90 = sbr.rel (%p87) target = $region12
      $region11: #{flip_forward.1} parent=5 // pred_region
        %s91 = ssub.s32 %s7, 1
      $region12: #{flip_forward.1} parent=5 // pred_fallthru
        _
      %p92 = scmp.lt.s32.totalorder %s7, 2
      // Predicated region
      $region13: #{flip_forward.1} parent=5 // pred_check
        %p93 = pneg %p92
      $region14: #{flip_forward.1} parent=5 // pred_check_branch
        %95 = sbr.rel (%p93) target = $region16
      $region15: #{flip_forward.1} parent=5 // pred_region
        // Predicated region
        $region17: #{flip_forward.1} parent=15 // pred_check
          %p96 = pneg %p43
        $region18: #{flip_forward.1} parent=15 // pred_check_branch
          %98 = sbr.rel (%p96) target = $region20
        $region19: #{flip_forward.1} parent=15 // pred_region
          %s99 = sand.u32 %s33, 1
          %s100 = sand.u32 %s33, 1
          %s101 = smul.addr %s100, 8
          %s102 = scalar_lea.vmem [#allocation2], %s101
          %s103 = ssub.s32 1, %s14
          %s104 = smul.u32 2, %s103
          %s105 = sadd.s32 %s15, %s104
          %s106 = smul.addr %s105, 2
          %s107 = scalar_lea.vmem %s0, %s106
          // Predicated region
          $region21: #{flip_forward.1} parent=19 // pred_check
            _
          $region22: #{flip_forward.1} parent=19 // pred_check_branch
            %109 = sbr.rel (0) target = $region24
          $region23: #{flip_forward.1} parent=19 // pred_region
            // Predicated region
            $region25: #{flip_forward.1} parent=23 // pred_check
              _
            $region26: #{flip_forward.1} parent=23 // pred_check_branch
              %111 = sbr.rel target = $region28
            $region27: #{flip_forward.1} parent=23 // pred_region
              // Predicated region
              $region40: #{flip_forward.1} parent=27 // pred_check
                _
              $region41: #{flip_forward.1} parent=27 // pred_check_branch
                %132 = sbr.rel (0) target = $region43
              $region42: #{flip_forward.1} parent=27 // pred_region
                loop: start=0, step=1, limit=1
                $region44: #{flip_forward.1} parent=42 // loop_pre_header
                  _
                $region45: #{flip_forward.1} parent=42 // loop_header
                  %s134 = sphi 0, %s138
                  %p135 = scmp.ge.s32.totalorder %s134, 1
                  %s139 = sphi %s107, %s107
                  %s140 = sphi %s102, %s102
                $region46: #{flip_forward.1} parent=42 // loop_header_branch
                  %137 = sbr.rel (%p135) target = $region50
                $region47: #{flip_forward.1} parent=42 // loop_body
                  _
                $region48: #{flip_forward.1} parent=42 // loop_footer
                  %s138 = sadd.s32 1, %s134
                $region49: #{flip_forward.1} parent=42 // loop_footer_branch
                  %133 = sbr.rel target = $region45
                $region50: #{flip_forward.1} parent=42 // loop_exit
                  _
                loop: start=0, step=1, limit=1
                $region51: #{flip_forward.1} parent=42 // loop_pre_header
                  _
                $region52: #{flip_forward.1} parent=42 // loop_header
                  %s143 = sphi 0, %s147
                  %p144 = scmp.ge.s32.totalorder %s143, 1
                  %s148 = sphi %s107, %s107
                  %s149 = sphi %s102, %s102
                $region53: #{flip_forward.1} parent=42 // loop_header_branch
                  %146 = sbr.rel (%p144) target = $region57
                $region54: #{flip_forward.1} parent=42 // loop_body
                  %v150 = vld [vmem:[%s148] sm:$0x3]
                  %151 = vst [vmem:[%s149] sm:$0x3] %v150
                  %v152 = vld [vmem:[%s148 + $0x2] sm:$0x3]
                  %153 = vst [vmem:[%s149 + $0x2] sm:$0x3] %v152
                  %v154 = vld [vmem:[%s148 + $0x8] sm:$0x3]
                  %155 = vst [vmem:[%s149 + $0x4] sm:$0x3] %v154
                  %v156 = vld [vmem:[%s148 + $0xa] sm:$0x3]
                  %157 = vst [vmem:[%s149 + $0x6] sm:$0x3] %v156
                $region55: #{flip_forward.1} parent=42 // loop_footer
                  %s147 = sadd.s32 1, %s143
                $region56: #{flip_forward.1} parent=42 // loop_footer_branch
                  %142 = sbr.rel target = $region52
                $region57: #{flip_forward.1} parent=42 // loop_exit
                  _
              $region43: #{flip_forward.1} parent=27 // pred_fallthru
                _
            $region28: #{flip_forward.1} parent=23 // pred_fallthru
              _
            // Predicated region
            $region29: #{flip_forward.1} parent=23 // pred_check
              _
            $region30: #{flip_forward.1} parent=23 // pred_check_branch
              %113 = sbr.rel (0) target = $region32
            $region31: #{flip_forward.1} parent=23 // pred_region
              loop: start=0, step=1, limit=1
              $region33: #{flip_forward.1} parent=31 // loop_pre_header
                _
              $region34: #{flip_forward.1} parent=31 // loop_header
                %s116 = sphi 0, %s120
                %p117 = scmp.ge.s32.totalorder %s116, 1
                %s121 = sphi %s107, %s107
                %s122 = sphi %s102, %s102
              $region35: #{flip_forward.1} parent=31 // loop_header_branch
                %119 = sbr.rel (%p117) target = $region39
              $region36: #{flip_forward.1} parent=31 // loop_body
                %v123 = vld [vmem:[%s121] sm:$0x3]
                %124 = vst [vmem:[%s122] sm:$0x3] %v123
                %v125 = vld [vmem:[%s121 + $0x2] sm:$0x3]
                %126 = vst [vmem:[%s122 + $0x2] sm:$0x3] %v125
                %v127 = vld [vmem:[%s121 + $0x8] sm:$0x3]
                %128 = vst [vmem:[%s122 + $0x4] sm:$0x3] %v127
                %v129 = vld [vmem:[%s121 + $0xa] sm:$0x3]
                %130 = vst [vmem:[%s122 + $0x6] sm:$0x3] %v129
              $region37: #{flip_forward.1} parent=31 // loop_footer
                %s120 = sadd.s32 1, %s116
              $region38: #{flip_forward.1} parent=31 // loop_footer_branch
                %115 = sbr.rel target = $region34
              $region39: #{flip_forward.1} parent=31 // loop_exit
                _
            $region32: #{flip_forward.1} parent=23 // pred_fallthru
              _
          $region24: #{flip_forward.1} parent=19 // pred_fallthru
            _
          %158 = vnop
        $region20: #{flip_forward.1} parent=15 // pred_fallthru
          _
      $region16: #{flip_forward.1} parent=5 // pred_fallthru
        _
      %p159 = scmp.le.s32.totalorder 1, %s7
      %p160 = scmp.lt.s32.totalorder %s7, 3
      %p161 = pnand %p159, %p160
      %p162 = pneg %p161
      // Predicated region
      $region58: #{flip_forward.1} parent=5 // pred_check
        _
      $region59: #{flip_forward.1} parent=5 // pred_check_branch
        %164 = sbr.rel (%p161) target = $region61
      $region60: #{flip_forward.1} parent=5 // pred_region
        %s165 = ssub.s32 %s7, 1
        %s166 = sand.u32 %s36, 1
        %s167 = sand.u32 %s36, 1
        %s168 = smul.addr %s167, 8
        %s169 = scalar_lea.vmem [#allocation2], %s168
        // Predicated region
        $region62: #{flip_forward.1} parent=60 // pred_check
          %p170 = pneg %p49
        $region63: #{flip_forward.1} parent=60 // pred_check_branch
          %172 = sbr.rel (%p170) target = $region65
        $region64: #{flip_forward.1} parent=60 // pred_region
          _
        $region65: #{flip_forward.1} parent=60 // pred_fallthru
          _
        %s173 = sand.u32 %s36, 1
        %s174 = sand.u32 %s36, 1
        %s175 = smul.addr %s174, 8
        %s176 = scalar_lea.vmem [#allocation2], %s175
        %p177 = pneg %p49
        %p178 = pneg %p46
        %p179 = pneg %p77
        %p180 = pneg %p74
        %s181 = sand.u32 %s64, 1
        %s182 = sand.u32 %s64, 1
        %s183 = smul.addr %s182, 8
        %s184 = scalar_lea.vmem [#allocation3], %s183
        %s185 = ssub.s32 1, %s16
        %s186 = smul.u32 2, %s185
        %s187 = smul.u32 2, %s16
        %s188 = scalar_lea.vmem %s169, 2 [#allocation2]
        %v189 = vld [vmem:[%s188] sm:$0x3]
        %v190 = vld [vmem:[%s188 + $0x4] sm:$0x3]
        %191 = vst [vmem:[%s184] sm:$0x3] %v189
        %192 = vst [vmem:[%s184 + $0x4] sm:$0x3] %v190
        %v193 = vld [vmem:[%s169] sm:$0x3]
        %v194 = vld [vmem:[%s169 + $0x4] sm:$0x3]
        %s195 = scalar_lea.vmem %s184, 2 [#allocation3]
        %196 = vst [vmem:[%s195] sm:$0x3] %v193
        %197 = vst [vmem:[%s195 + $0x4] sm:$0x3] %v194
        %s198 = sand.u32 %s64, 1
        %s199 = sand.u32 %s64, 1
        %s200 = smul.addr %s199, 8
        %s201 = scalar_lea.vmem [#allocation3], %s200
        // Predicated region
        $region66: #{flip_forward.1} parent=60 // pred_check
          %p202 = pneg %p74
        $region67: #{flip_forward.1} parent=60 // pred_check_branch
          %204 = sbr.rel (%p202) target = $region69
        $region68: #{flip_forward.1} parent=60 // pred_region
          %s205 = smul.u32 2, %s16
          %s206 = sadd.s32 %s17, %s205
          %s207 = smul.addr %s206, 2
          %s208 = scalar_lea.vmem %s1, %s207
          // Predicated region
          $region70: #{flip_forward.1} parent=68 // pred_check
            _
          $region71: #{flip_forward.1} parent=68 // pred_check_branch
            %210 = sbr.rel (0) target = $region73
          $region72: #{flip_forward.1} parent=68 // pred_region
            // Predicated region
            $region74: #{flip_forward.1} parent=72 // pred_check
              _
            $region75: #{flip_forward.1} parent=72 // pred_check_branch
              %212 = sbr.rel target = $region77
            $region76: #{flip_forward.1} parent=72 // pred_region
              // Predicated region
              $region89: #{flip_forward.1} parent=76 // pred_check
                _
              $region90: #{flip_forward.1} parent=76 // pred_check_branch
                %233 = sbr.rel (0) target = $region92
              $region91: #{flip_forward.1} parent=76 // pred_region
                loop: start=0, step=1, limit=1
                $region93: #{flip_forward.1} parent=91 // loop_pre_header
                  _
                $region94: #{flip_forward.1} parent=91 // loop_header
                  %s235 = sphi 0, %s239
                  %p236 = scmp.ge.s32.totalorder %s235, 1
                  %s240 = sphi %s201, %s201
                  %s241 = sphi %s208, %s208
                $region95: #{flip_forward.1} parent=91 // loop_header_branch
                  %238 = sbr.rel (%p236) target = $region99
                $region96: #{flip_forward.1} parent=91 // loop_body
                  _
                $region97: #{flip_forward.1} parent=91 // loop_footer
                  %s239 = sadd.s32 1, %s235
                $region98: #{flip_forward.1} parent=91 // loop_footer_branch
                  %234 = sbr.rel target = $region94
                $region99: #{flip_forward.1} parent=91 // loop_exit
                  _
                loop: start=0, step=1, limit=1
                $region100: #{flip_forward.1} parent=91 // loop_pre_header
                  _
                $region101: #{flip_forward.1} parent=91 // loop_header
                  %s244 = sphi 0, %s248
                  %p245 = scmp.ge.s32.totalorder %s244, 1
                  %s249 = sphi %s201, %s201
                  %s250 = sphi %s208, %s208
                $region102: #{flip_forward.1} parent=91 // loop_header_branch
                  %247 = sbr.rel (%p245) target = $region106
                $region103: #{flip_forward.1} parent=91 // loop_body
                  %v251 = vld [vmem:[%s249] sm:$0x3]
                  %252 = vst [vmem:[%s250] sm:$0x3] %v251
                  %v253 = vld [vmem:[%s249 + $0x2] sm:$0x3]
                  %254 = vst [vmem:[%s250 + $0x2] sm:$0x3] %v253
                  %v255 = vld [vmem:[%s249 + $0x4] sm:$0x3]
                  %256 = vst [vmem:[%s250 + $0x8] sm:$0x3] %v255
                  %v257 = vld [vmem:[%s249 + $0x6] sm:$0x3]
                  %258 = vst [vmem:[%s250 + $0xa] sm:$0x3] %v257
                $region104: #{flip_forward.1} parent=91 // loop_footer
                  %s248 = sadd.s32 1, %s244
                $region105: #{flip_forward.1} parent=91 // loop_footer_branch
                  %243 = sbr.rel target = $region101
                $region106: #{flip_forward.1} parent=91 // loop_exit
                  _
              $region92: #{flip_forward.1} parent=76 // pred_fallthru
                _
            $region77: #{flip_forward.1} parent=72 // pred_fallthru
              _
            // Predicated region
            $region78: #{flip_forward.1} parent=72 // pred_check
              _
            $region79: #{flip_forward.1} parent=72 // pred_check_branch
              %214 = sbr.rel (0) target = $region81
            $region80: #{flip_forward.1} parent=72 // pred_region
              loop: start=0, step=1, limit=1
              $region82: #{flip_forward.1} parent=80 // loop_pre_header
                _
              $region83: #{flip_forward.1} parent=80 // loop_header
                %s217 = sphi 0, %s221
                %p218 = scmp.ge.s32.totalorder %s217, 1
                %s222 = sphi %s201, %s201
                %s223 = sphi %s208, %s208
              $region84: #{flip_forward.1} parent=80 // loop_header_branch
                %220 = sbr.rel (%p218) target = $region88
              $region85: #{flip_forward.1} parent=80 // loop_body
                %v224 = vld [vmem:[%s222] sm:$0x3]
                %225 = vst [vmem:[%s223] sm:$0x3] %v224
                %v226 = vld [vmem:[%s222 + $0x2] sm:$0x3]
                %227 = vst [vmem:[%s223 + $0x2] sm:$0x3] %v226
                %v228 = vld [vmem:[%s222 + $0x4] sm:$0x3]
                %229 = vst [vmem:[%s223 + $0x8] sm:$0x3] %v228
                %v230 = vld [vmem:[%s222 + $0x6] sm:$0x3]
                %231 = vst [vmem:[%s223 + $0xa] sm:$0x3] %v230
              $region86: #{flip_forward.1} parent=80 // loop_footer
                %s221 = sadd.s32 1, %s217
              $region87: #{flip_forward.1} parent=80 // loop_footer_branch
                %216 = sbr.rel target = $region83
              $region88: #{flip_forward.1} parent=80 // loop_exit
                _
            $region81: #{flip_forward.1} parent=72 // pred_fallthru
              _
          $region73: #{flip_forward.1} parent=68 // pred_fallthru
            _
          %259 = vnop
        $region69: #{flip_forward.1} parent=60 // pred_fallthru
          _
      $region61: #{flip_forward.1} parent=5 // pred_fallthru
        _
      %p260 = scmp.le.s32.totalorder 2, %s7
      // Predicated region
      $region107: #{flip_forward.1} parent=5 // pred_check
        %p261 = pneg %p260
      $region108: #{flip_forward.1} parent=5 // pred_check_branch
        %263 = sbr.rel (%p261) target = $region110
      $region109: #{flip_forward.1} parent=5 // pred_region
        %s264 = ssub.s32 %s7, 2
        // Predicated region
        $region111: #{flip_forward.1} parent=109 // pred_check
          %p265 = pneg %p80
        $region112: #{flip_forward.1} parent=109 // pred_check_branch
          %267 = sbr.rel (%p265) target = $region114
        $region113: #{flip_forward.1} parent=109 // pred_region
          %s268 = sand.u32 %s65, 1
          %s269 = sand.u32 %s65, 1
          %s270 = smul.addr %s269, 8
          %s271 = scalar_lea.vmem [#allocation3], %s270
        $region114: #{flip_forward.1} parent=109 // pred_fallthru
          _
      $region110: #{flip_forward.1} parent=5 // pred_fallthru
        _
    $region6: #{flip_forward.1} parent=1 // loop_footer
      %s11 = sadd.s32 1, %s7
    $region7: #{flip_forward.1} parent=1 // loop_footer_branch
      %6 = sbr.rel target = $region3
    $region8: #{flip_forward.1} parent=1 // loop_exit
      _

</llo_original>
